<compile_context>
chip_gen: v5e
topology: v5e:2x2
jax: 0.10.0
libtpu: 0.0.40
codegen_flags: <defaults>
</compile_context>

<pallas_src>
import functools

import jax
import jax.numpy as jnp
from jax import lax
from jax.experimental import pallas as pl
from jax.experimental.pallas import tpu as pltpu


def _round_up(v, m):
    return ((v + m - 1) // m) * m


def _global_mean_pool_kernel(batch_ref, x_ref, out_ref, sum_acc, cnt_acc,
                             *, num_nodes, b_chunk):
    """Grid = (F_tiles, N_tiles); N (reduction) is the innermost grid axis."""
    n = pl.program_id(1)
    n_last = pl.num_programs(1) - 1

    @pl.when(n == 0)
    def _init():
        sum_acc[...] = jnp.zeros_like(sum_acc)
        cnt_acc[...] = jnp.zeros_like(cnt_acc)

    B_pad = sum_acc.shape[0]
    TN = x_ref.shape[0]

    # x is unpadded in HBM, so the tail of the last node tile may contain
    # garbage (possibly NaN/Inf). Zero those rows before they reach the MXU
    # (0 * NaN in the matmul would poison the accumulator). Statically skipped
    # when the node tiling is exact.
    if num_nodes % TN != 0:
        row_ids = n * TN + lax.broadcasted_iota(jnp.int32, (TN, 1), 0)
        x_tile = jnp.where(row_ids < num_nodes, x_ref[...], 0).astype(x_ref.dtype)
    else:
        x_tile = x_ref[...]

    batch_ids = batch_ref[...]  # [1, TN] int32 (padded entries carry B_pad -> no match)

    def _accumulate(b0, nb, full):
        # One-hot built once, directly in the matmul dtype (0/1 exact in bf16).
        gids = b0 + lax.broadcasted_iota(jnp.int32, (nb, TN), 0)     # [nb, TN]
        onehot = (gids == batch_ids).astype(x_tile.dtype)            # [nb, TN]
        cnt_upd = jnp.sum(onehot, axis=1, keepdims=True, dtype=jnp.float32)
        sum_upd = jnp.dot(onehot, x_tile, preferred_element_type=jnp.float32)
        if full:
            cnt_acc[...] += cnt_upd
            sum_acc[...] += sum_upd
        else:
            cnt_acc[pl.ds(b0, nb), :] += cnt_upd
            sum_acc[pl.ds(b0, nb), :] += sum_upd

    if B_pad <= b_chunk:
        _accumulate(0, B_pad, full=True)
    else:
        # Chunk over graphs so the [nb, TN] one-hot stays register-resident
        # (a [1024, 1024] f32 one-hot would be ~1024 vregs -> guaranteed spills).
        for b0 in range(0, B_pad, b_chunk):
            nb = min(b_chunk, B_pad - b0)
            _accumulate(b0, nb, full=False)

    @pl.when(n == n_last)
    def _finalize():
        inv = pl.reciprocal(jnp.maximum(cnt_acc[...], 1.0), approx=False)
        out_ref[...] = (sum_acc[...] * inv).astype(out_ref.dtype)


def _choose_tiles(N, F_out, B_pad, x_itemsize, out_itemsize,
                  tile_n_req, tile_f_req, vmem_budget):
    """Pick (tile_n, tile_f, est_bytes) under a VMEM budget.

    tile_f is a multiple of 128 that evenly divides F_out (no over-read of x
    along F); tile_n is either >= N (single node tile, rounded to 8) or a
    multiple of 128.
    """
    def pick_tile_f(cap):
        cap = max(128, (min(cap, F_out) // 128) * 128)
        m = F_out // 128
        for d in range(m, 0, -1):
            if m % d == 0 and d * 128 <= cap:
                return d * 128
        return 128

    def pick_tile_n(cap):
        if N <= cap:
            return _round_up(max(N, 1), 8)
        return max(128, (cap // 128) * 128)

    tn_cap, tf_cap = tile_n_req, tile_f_req
    while True:
        tn = pick_tile_n(tn_cap)
        tf = pick_tile_f(tf_cap)
        est = (2 * tn * tf * x_itemsize          # x tile, double-buffered
               + 2 * tn * 4                      # batch-id tile, double-buffered
               + 2 * B_pad * tf * out_itemsize   # output block, double-buffered
               + B_pad * tf * 4                  # f32 sum accumulator
               + B_pad * 128 * 4)                # f32 count accumulator (lane pad)
        if est <= vmem_budget or (tn <= 256 and tf <= 128):
            return tn, tf, est
        if tn > 256:
            tn_cap = max(256, tn // 2)
        else:
            tf_cap = max(128, tf // 2)


def global_mean_pool(x, batch, num_graphs, *, tile_n=1024, tile_f=512):
    """x: [N, F] float, batch: [N] int (values in [0, num_graphs)), static B."""
    N, F = x.shape
    B = int(num_graphs)

    B_pad = _round_up(max(B, 1), 8)
    F_out = _round_up(F, 128)                      # output padded to lane width only

    x_itemsize = jnp.dtype(x.dtype).itemsize
    vmem_budget = 40 * 1024 * 1024                 # safe on v5e/v6e/v7x
    tile_n, tile_f, vmem_est = _choose_tiles(
        N, F_out, B_pad, x_itemsize, x_itemsize, tile_n, tile_f, vmem_budget)
    N_pad = _round_up(N, tile_n)

    # Only the tiny int32 batch vector is padded; padded nodes get an
    # out-of-range graph id so they never match the one-hot. x itself is
    # passed unpadded (no extra HBM copy); ragged tails are handled in-kernel.
    batch_2d = jnp.pad(batch.astype(jnp.int32), (0, N_pad - N),
                       constant_values=B_pad).reshape(1, N_pad)

    cost = pl.CostEstimate(
        flops=2 * B_pad * N_pad * F_out,
        transcendentals=0,
        bytes_accessed=N * F * x_itemsize + B_pad * F_out * x_itemsize + 4 * N_pad,
    )

    grid = (F_out // tile_f, N_pad // tile_n)

    kernel = functools.partial(_global_mean_pool_kernel,
                               num_nodes=N, b_chunk=256)

    out_pad = pl.pallas_call(
        kernel,
        out_shape=jax.ShapeDtypeStruct((B_pad, F_out), x.dtype),
        grid_spec=pltpu.PrefetchScalarGridSpec(
            num_scalar_prefetch=0,
            grid=grid,
            in_specs=[
                pl.BlockSpec((1, tile_n), lambda f, n: (0, n)),       # batch ids
                pl.BlockSpec((tile_n, tile_f), lambda f, n: (n, f)),  # x tile
            ],
            out_specs=pl.BlockSpec((B_pad, tile_f), lambda f, n: (0, f)),
            scratch_shapes=[
                pltpu.VMEM((B_pad, tile_f), jnp.float32),  # per-graph sums
                pltpu.VMEM((B_pad, 1), jnp.float32),       # per-graph counts
            ],
        ),
        compiler_params=pltpu.CompilerParams(
            dimension_semantics=("parallel", "arbitrary"),
            vmem_limit_bytes=int(min(64 * 1024 * 1024,
                                     max(32 * 1024 * 1024, vmem_est * 3 // 2))),
        ),
        cost_estimate=cost,
    )(batch_2d, x)

    return out_pad[:B, :F]


def _reference(x, batch, B):
    seg_sum = jax.ops.segment_sum(x, batch, num_segments=B)
    seg_cnt = jax.ops.segment_sum(jnp.ones((x.shape[0], 1), jnp.float32), batch,
                                  num_segments=B)
    return seg_sum / jnp.maximum(seg_cnt, 1.0)


if __name__ == "__main__":
    key = jax.random.PRNGKey(0)

    # Case 1: nicely shaped small batch (2 graphs, 16 nodes, 32 features).
    N, F, B = 16, 32, 2
    k1, k2 = jax.random.split(key)
    x = jax.random.normal(k1, (N, F), dtype=jnp.float32)
    batch = jnp.concatenate(
        [jnp.zeros((7,), jnp.int32), jnp.ones((9,), jnp.int32)])
    out = jax.block_until_ready(global_mean_pool(x, batch, B))
    ref = _reference(x, batch, B)
    assert out.shape == (B, F)
    assert jnp.allclose(out, ref, atol=1e-5, rtol=1e-5)

    # Case 2: ragged N (not a multiple of 8) and F (not a multiple of 128),
    # exercising the in-kernel row mask and the padded-output slicing.
    N2, F2, B2 = 13, 20, 3
    x2 = jax.random.normal(k2, (N2, F2), dtype=jnp.float32)
    batch2 = jnp.concatenate([jnp.full((4,), 0, jnp.int32),
                              jnp.full((6,), 1, jnp.int32),
                              jnp.full((3,), 2, jnp.int32)])
    out2 = jax.block_until_ready(global_mean_pool(x2, batch2, B2))
    ref2 = _reference(x2, batch2, B2)
    assert out2.shape == (B2, F2)
    assert jnp.allclose(out2, ref2, atol=1e-5, rtol=1e-5)

    print("KERNEL_OK")
</pallas_src>

<mosaic_0001>
module attributes {stable_mosaic.version = 11 : i64} {
  func.func @_global_mean_pool_kernel(%arg0: i32, %arg1: i32, %arg2: memref<1x16xi32, #tpu.memory_space<vmem>>, %arg3: memref<16x128xf32, #tpu.memory_space<vmem>>, %arg4: memref<8x128xf32, #tpu.memory_space<vmem>>, %arg5: memref<8x128xf32, #tpu.memory_space<vmem>>, %arg6: memref<8x1xf32, #tpu.memory_space<vmem>>) attributes {dimension_semantics = [#tpu.dimension_semantics<parallel>, #tpu.dimension_semantics<arbitrary>], iteration_bounds = array<i64: 1, 1>, scalar_prefetch = 0 : i64, scratch_operands = 2 : i64, tpu.core_type = #tpu.core_type<tc>, window_params = [{transform_indices = @transform_0, window_bounds = array<i64: 1, 16>}, {transform_indices = @transform_1, window_bounds = array<i64: 16, 128>}, {transform_indices = @transform_2, window_bounds = array<i64: 8, 128>}]} {
    %c0_i32 = arith.constant 0 : i32
    %0 = arith.cmpi eq, %arg1, %c0_i32 : i32
    %1 = arith.extui %0 : i1 to i32
    %c0_i32_0 = arith.constant 0 : i32
    %2 = arith.cmpi ne, %1, %c0_i32_0 : i32
    scf.if %2 {
      %cst_16 = arith.constant 0.000000e+00 : f32
      %24 = vector.broadcast %cst_16 : f32 to vector<8x128xf32>
      %c0_17 = arith.constant 0 : index
      %c0_18 = arith.constant 0 : index
      %25 = vector.load %arg5[%c0_17, %c0_18] : memref<8x128xf32, #tpu.memory_space<vmem>>, vector<8x128xf32>
      tpu.vector_store %arg5[%c0_17, %c0_18], %24 {strides = array<i32>} : memref<8x128xf32, #tpu.memory_space<vmem>>, vector<8x128xf32>,
      %cst_19 = arith.constant 0.000000e+00 : f32
      %26 = vector.broadcast %cst_19 : f32 to vector<8x1xf32>
      %c0_20 = arith.constant 0 : index
      %c0_21 = arith.constant 0 : index
      %27 = vector.load %arg6[%c0_20, %c0_21] : memref<8x1xf32, #tpu.memory_space<vmem>>, vector<8x1xf32>
      tpu.vector_store %arg6[%c0_20, %c0_21], %26 {strides = array<i32>} : memref<8x1xf32, #tpu.memory_space<vmem>>, vector<8x1xf32>,
    } else {
    }
    %c0 = arith.constant 0 : index
    %c0_1 = arith.constant 0 : index
    %3 = vector.load %arg3[%c0, %c0_1] : memref<16x128xf32, #tpu.memory_space<vmem>>, vector<16x128xf32>
    %c0_2 = arith.constant 0 : index
    %c0_3 = arith.constant 0 : index
    %4 = vector.load %arg2[%c0_2, %c0_3] : memref<1x16xi32, #tpu.memory_space<vmem>>, vector<1x16xi32>
    %5 = tpu.iota {dimensions = array<i32: 0>} : vector<8x16xi32>
    %c0_i32_4 = arith.constant 0 : i32
    %6 = vector.broadcast %c0_i32_4 : i32 to vector<8x16xi32>
    %7 = arith.addi %6, %5 : vector<8x16xi32>
    %8 = vector.broadcast %4 : vector<1x16xi32> to vector<8x16xi32>
    %9 = arith.cmpi eq, %7, %8 : vector<8x16xi32>
    %10 = arith.extui %9 : vector<8x16xi1> to vector<8x16xi32>
    %11 = arith.sitofp %10 : vector<8x16xi32> to vector<8x16xf32>
    %cst = arith.constant dense<0.000000e+00> : vector<8xf32>
    %12 = vector.multi_reduction <add>, %11, %cst [1] : vector<8x16xf32> to vector<8xf32>
    %13 = vector.shape_cast %12 : vector<8xf32> to vector<8x1xf32>
    %cst_5 = arith.constant dense<0.000000e+00> : vector<8x128xf32>
    %14 = tpu.matmul %11, %3, %cst_5 {dimension_numbers = #tpu.dot_dimension_numbers<[1], [0], [0], [1], [0, 0, 1, 1], [], []>} : vector<8x16xf32>, vector<16x128xf32>, vector<8x128xf32> -> vector<8x128xf32>
    %c0_6 = arith.constant 0 : index
    %c0_7 = arith.constant 0 : index
    %15 = vector.load %arg6[%c0_6, %c0_7] : memref<8x1xf32, #tpu.memory_space<vmem>>, vector<8x1xf32>
    %16 = arith.addf %15, %13 : vector<8x1xf32>
    %c0_8 = arith.constant 0 : index
    %c0_9 = arith.constant 0 : index
    %17 = vector.load %arg6[%c0_8, %c0_9] : memref<8x1xf32, #tpu.memory_space<vmem>>, vector<8x1xf32>
    tpu.vector_store %arg6[%c0_8, %c0_9], %16 {strides = array<i32>} : memref<8x1xf32, #tpu.memory_space<vmem>>, vector<8x1xf32>,
    %c0_10 = arith.constant 0 : index
    %c0_11 = arith.constant 0 : index
    %18 = vector.load %arg5[%c0_10, %c0_11] : memref<8x128xf32, #tpu.memory_space<vmem>>, vector<8x128xf32>
    %19 = arith.addf %18, %14 : vector<8x128xf32>
    %c0_12 = arith.constant 0 : index
    %c0_13 = arith.constant 0 : index
    %20 = vector.load %arg5[%c0_12, %c0_13] : memref<8x128xf32, #tpu.memory_space<vmem>>, vector<8x128xf32>
    tpu.vector_store %arg5[%c0_12, %c0_13], %19 {strides = array<i32>} : memref<8x128xf32, #tpu.memory_space<vmem>>, vector<8x128xf32>,
    %c0_i32_14 = arith.constant 0 : i32
    %21 = arith.cmpi eq, %arg1, %c0_i32_14 : i32
    %22 = arith.extui %21 : i1 to i32
    %c0_i32_15 = arith.constant 0 : i32
    %23 = arith.cmpi ne, %22, %c0_i32_15 : i32
    scf.if %23 {
      %c0_16 = arith.constant 0 : index
      %c0_17 = arith.constant 0 : index
      %24 = vector.load %arg6[%c0_16, %c0_17] : memref<8x1xf32, #tpu.memory_space<vmem>>, vector<8x1xf32>
      %cst_18 = arith.constant 1.000000e+00 : f32
      %25 = vector.broadcast %cst_18 : f32 to vector<8x1xf32>
      %26 = arith.maximumf %24, %25 : vector<8x1xf32>
      %27 = tpu.reciprocal %26 : vector<8x1xf32> -> vector<8x1xf32>
      %c0_19 = arith.constant 0 : index
      %c0_20 = arith.constant 0 : index
      %28 = vector.load %arg5[%c0_19, %c0_20] : memref<8x128xf32, #tpu.memory_space<vmem>>, vector<8x128xf32>
      %29 = vector.broadcast %27 : vector<8x1xf32> to vector<8x128xf32>
      %30 = arith.mulf %28, %29 : vector<8x128xf32>
      %c0_21 = arith.constant 0 : index
      %c0_22 = arith.constant 0 : index
      %31 = vector.load %arg4[%c0_21, %c0_22] : memref<8x128xf32, #tpu.memory_space<vmem>>, vector<8x128xf32>
      tpu.vector_store %arg4[%c0_21, %c0_22], %30 {strides = array<i32>} : memref<8x128xf32, #tpu.memory_space<vmem>>, vector<8x128xf32>,
    } else {
    }
    return
  }
  func.func @transform_0(%arg0: i32, %arg1: i32) -> (i32, i32) {
    %c0_i32 = arith.constant 0 : i32
    %c0_i32_0 = arith.constant 0 : i32
    return %c0_i32, %arg1 : i32, i32
  }
  func.func @transform_1(%arg0: i32, %arg1: i32) -> (i32, i32) {
    %c0_i32 = arith.constant 0 : i32
    return %arg1, %arg0 : i32, i32
  }
  func.func @transform_2(%arg0: i32, %arg1: i32) -> (i32, i32) {
    %c0_i32 = arith.constant 0 : i32
    %c0_i32_0 = arith.constant 0 : i32
    return %c0_i32, %arg0 : i32, i32
  }
}

</mosaic_0001>

<llo_original>
// kernel: tpu_custom_call.1
$region0: #{tpu_custom_call.1}
  #allocation0 [shape = 'u32[]', space=smem, size = 0x4, offset = 0x4, fixed_abs, tag = 'smem constant byte address 0x4 - core index']
  #allocation1 [shape = 'u32[72,128]{1,0:T(1,128)}', space=vmem, size = 0x9000, scoped, tag = 'internal scratch']
  #allocation2 [shape = 'f32[8,128]{1,0:T(8,128)}', space=vmem, size = 0x1000, scoped, tag = 'scratch operand']
  #allocation3 [shape = 'f32[8,1]{1,0:T(8,128)}', space=vmem, size = 0x1000, scoped, tag = 'scratch operand']
  %s0 = inlined_call_operand.hbm [shape: s32[1,16], index: 0, kind: input, shape index: {}]
  %s1 = inlined_call_operand.hbm [shape: f32[16,32], index: 1, kind: input, shape index: {}]
  %s2 = inlined_call_operand.hbm [shape: f32[8,128], index: 2, kind: output, shape index: {}]
  %s3 = sld [smem:[#allocation0]]
  $region34: #{tpu_custom_call.1} parent=0
    _
  %s5 = ssub.s32 1, %s3
  %s6 = scalar_select 0, %s5, %s3
  $region1: #{tpu_custom_call.1} parent=0
    #allocation4 [shape = 'u8[512]{0}', space=vmem, size = 0x400, scoped, tag = 'input window, operand 0, single buffered']
    #allocation5 [shape = 's32[1]{0}', space=sflag, size = 0x4, scoped, tag = 'scoped memory for tpu_custom_call.1']
    #allocation6 [shape = 's32[1]{0}', space=sflag, size = 0x4, scoped, tag = 'scoped memory for tpu_custom_call.1']
    #allocation7 [shape = 'u8[8192]{0}', space=vmem, size = 0x2000, scoped, tag = 'input window, operand 1, single buffered']
    #allocation8 [shape = 's32[1]{0}', space=sflag, size = 0x4, scoped, tag = 'scoped memory for tpu_custom_call.1']
    #allocation9 [shape = 'u8[4096]{0}', space=vmem, size = 0x1000, scoped, tag = 'output window, operand 0, single buffered']
    %7 = vsyncpa [#allocation5], 0
    %8 = vsyncpa [#allocation8], 0
    %9 = vsyncpa [#allocation6], 0
    // Predicated region
    $region2: #{tpu_custom_call.1} parent=1 // pred_check
      _
    $region3: #{tpu_custom_call.1} parent=1 // pred_check_branch
      %11 = sbr.rel (0) target = $region5
    $region4: #{tpu_custom_call.1} parent=1 // pred_region
      %13 = vsyncadd [#allocation5], 0
      %s15 = sshll.u32 %s0, 4
      %s16 = int_to_ptr.hbm [resolvable:$true] %s15
      %s17 = sshll.u32 [#allocation4], 4
      %s18 = int_to_ptr.vmem [resolvable:$true] %s17
      %20 = dma.hbm_to_vmem [thread:$0]  %s16, 16, %s18, [#allocation5]
    $region5: #{tpu_custom_call.1} parent=1 // pred_fallthru
      _
    // Predicated region
    $region6: #{tpu_custom_call.1} parent=1 // pred_check
      _
    $region7: #{tpu_custom_call.1} parent=1 // pred_check_branch
      %22 = sbr.rel (0) target = $region9
    $region8: #{tpu_custom_call.1} parent=1 // pred_region
      %24 = vsyncadd [#allocation8], 0
      %s25 = sshll.u32 %s1, 4
      %s26 = int_to_ptr.hbm [resolvable:$true] %s25
      %s27 = sshll.u32 [#allocation7], 4
      %s28 = int_to_ptr.vmem [resolvable:$true] %s27
      %33 = dma.hbm_to_vmem [thread:$0]  %s26, 256, %s28, [#allocation8], 128, 128, 8
    $region9: #{tpu_custom_call.1} parent=1 // pred_fallthru
      _
    // Predicated region
    $region10: #{tpu_custom_call.1} parent=1 // pred_check
      _
    $region11: #{tpu_custom_call.1} parent=1 // pred_check_branch
      %35 = sbr.rel (0) target = $region13
    $region12: #{tpu_custom_call.1} parent=1 // pred_region
      %37 = dma.done [#allocation5], 16
    $region13: #{tpu_custom_call.1} parent=1 // pred_fallthru
      _
    // Predicated region
    $region14: #{tpu_custom_call.1} parent=1 // pred_check
      _
    $region15: #{tpu_custom_call.1} parent=1 // pred_check_branch
      %39 = sbr.rel (0) target = $region17
    $region16: #{tpu_custom_call.1} parent=1 // pred_region
      %41 = dma.done [#allocation8], 256
    $region17: #{tpu_custom_call.1} parent=1 // pred_fallthru
      _
    %p42 = scmp.eq.s32.totalorder 0, 0
    // Predicated region
    $region18: #{tpu_custom_call.1} parent=1 // pred_check
      %p43 = pneg %p42
    $region19: #{tpu_custom_call.1} parent=1 // pred_check_branch
      %45 = sbr.rel (%p43) target = $region21
    $region20: #{tpu_custom_call.1} parent=1 // pred_region
      %46 = vst [vmem:[#allocation2] sm:$0xff] 0.0
      %vm47 = vcmask 7168
      %48 = vst.msk [vmem:[#allocation3] sm:$0xff] %vm47, 0.0
    $region21: #{tpu_custom_call.1} parent=1 // pred_fallthru
      _
    %v49 = vld [vmem:[#allocation7] sm:$0xff]
    %v50 = vld [vmem:[#allocation7 + $0x8] sm:$0xff]
    %v51 = vld [vmem:[#allocation4] sm:$0x1]
    %v52 = vlaneseq
    %v53 = vshrl.u32 %v52, 7
    %v54 = vperm.slane %v51, 0
    %vm55 = vcmp.eq.s32.totalorder %v53, %v54
    %v56 = vsel %vm55, 1, 0
    %v57 = vcvt.s32.f32 %v56
    %vm58 = vcmask 130048
    %v59 = vsel %vm58, %v57, 0.0
    %60 = vadd.xlane.f32.xlu0 %v59
    %v61 = vpop.xlane.xlu0 %60
    %v63 = vsel %vm58, %v57, 0
    %65 = vmatpush.msra.mxu0 0.0
    %66 = vmatpush.msra.mxu0 0.0
    %67 = vmatpush.msra.mxu0 0.0
    %68 = vmatpush.msra.mxu0 0.0
    %69 = vmatpush.msra.mxu0 0.0
    %70 = vmatpush.msra.mxu0 0.0
    %71 = vmatpush.msra.mxu0 0.0
    %72 = vmatpush.msra.mxu0 0.0
    %73 = vmatpush.msra.mxu0 0.0
    %74 = vmatpush.msra.mxu0 0.0
    %75 = vmatpush.msra.mxu0 0.0
    %76 = vmatpush.msra.mxu0 0.0
    %77 = vmatpush.msra.mxu0 0.0
    %78 = vmatpush.msra.mxu0 0.0
    %79 = vmatpush.msra.mxu0 %v50
    %80 = vmatpush.msra.mxu0 %v49
    %81 = vmatmul.f32.gmra.mxu0 %v63
    %v82 = vpop.f32.mrf.mxu0
    %v83 = vadd.f32 0.0, %v82
    %84 = vdwg.mxu0
    %v85 = vld [vmem:[#allocation3] sm:$0xff]
    %v86 = vadd.f32 %v85, %v61
    %vm87 = vcmask 7168
    %88 = vst.msk [vmem:[#allocation3] sm:$0xff] %vm87, %v86
    %v89 = vld [vmem:[#allocation2] sm:$0xff]
    %v90 = vadd.f32 %v89, %v83
    %91 = vst [vmem:[#allocation2] sm:$0xff] %v90
    // Predicated region
    $region22: #{tpu_custom_call.1} parent=1 // pred_check
      %p92 = pneg %p42
    $region23: #{tpu_custom_call.1} parent=1 // pred_check_branch
      %94 = sbr.rel (%p92) target = $region25
    $region24: #{tpu_custom_call.1} parent=1 // pred_region
      %v95 = vld [vmem:[#allocation3] sm:$0xff]
      %v96 = vmax.f32 %v95, 1.0
      %v97 = vrcp.pop %v96
      %v98 = vmul.f32 %v96, %v97
      %v99 = vsub.f32 1.0, %v98
      %v100 = vmul.f32 %v97, %v99
      %v101 = vadd.f32 %v97, %v100
      %vm102 = vweird.f32 %v96
      %vm103 = vweird.f32 %v97
      %vm104 = vmor %vm102, %vm103
      %v105 = vsel %vm104, %v97, %v101
      %v106 = vand.u32 2147483647, %v96
      %vm107 = vcmp.eq.f32.partialorder %v106, 8.507059e+37
      %v108 = vand.u32 %v96, 2147483648
      %v109 = vor.u32 1.1754944e-38, %v108
      %v110 = vsel %vm107, %v109, %v105
      %v111 = vld [vmem:[#allocation2] sm:$0xff]
      %113 = vset.pattern.permute.xlu0 0
      %114 = vperm.xlu0 %113, %v110
      %v115 = vpop.permute.xlu0 %114
      %v117 = vmul.f32 %v111, %v115
      %118 = vst [vmem:[#allocation9] sm:$0xff] %v117
    $region25: #{tpu_custom_call.1} parent=1 // pred_fallthru
      _
    // Predicated region
    $region26: #{tpu_custom_call.1} parent=1 // pred_check
      _
    $region27: #{tpu_custom_call.1} parent=1 // pred_check_branch
      %120 = sbr.rel (0) target = $region29
    $region28: #{tpu_custom_call.1} parent=1 // pred_region
      %122 = vsyncadd [#allocation6], 0
      %s124 = sshll.u32 [#allocation9], 4
      %s125 = int_to_ptr.vmem [resolvable:$true] %s124
      %s126 = sshll.u32 %s2, 4
      %s127 = int_to_ptr.hbm [resolvable:$true] %s126
      %129 = dma.vmem_to_hbm [thread:$0]  %s125, 128, %s127, [#allocation6]
    $region29: #{tpu_custom_call.1} parent=1 // pred_fallthru
      _
    // Predicated region
    $region30: #{tpu_custom_call.1} parent=1 // pred_check
      _
    $region31: #{tpu_custom_call.1} parent=1 // pred_check_branch
      %131 = sbr.rel (0) target = $region33
    $region32: #{tpu_custom_call.1} parent=1 // pred_region
      %133 = dma.done [#allocation6], 128
    $region33: #{tpu_custom_call.1} parent=1 // pred_fallthru
      _
    %134 = vsyncpa [#allocation5], 1
    %135 = vsyncpa [#allocation8], 1
    %136 = vsyncpa [#allocation6], 1

</llo_original>
